<compile_context>
chip_gen: v6e
topology: v6e:2x2x1
jax: 0.10.0
libtpu: 0.0.40
codegen_flags: <defaults>
</compile_context>

<pallas_src>
import functools

import jax
import jax.numpy as jnp
from jax import lax
from jax.experimental import pallas as pl
from jax.experimental.pallas import tpu as pltpu

HIDDEN = 128      # affine1 output width
HEAD_PAD = 128    # lane-dense width of the fused head weight / merged output


def _round_up(x, m):
    return (x + m - 1) // m * m


def policy_kernel(x_ref, w1_ref, wh_ref, b_ref, out_ref):
    """One batch tile. Output columns: [0]=P(a0), [1]=P(a1), [2]=state value, [3:]=0."""
    x = x_ref[...]                                                    # (TB, D_obs) f32

    # affine1 + ReLU (MXU matmul, VPU max).  b_ref row 0 = b1.
    h = jnp.dot(x, w1_ref[...], preferred_element_type=jnp.float32) + b_ref[0:1, :]
    h = jnp.maximum(h, 0.0)                                           # (TB, 128)

    # Fused action/value heads in a single 128-wide MXU pass.  b_ref row 1 = [ba, bv, 0...].
    heads = jnp.dot(h, wh_ref[...], preferred_element_type=jnp.float32) + b_ref[1:2, :]

    l0 = heads[:, 0:1]
    l1 = heads[:, 1:2]
    v = heads[:, 2:3]

    # softmax over 2 classes == [sigmoid(l0 - l1), 1 - sigmoid(l0 - l1)]
    # (EUP exp + VPU divide; no XLU cross-lane reduce needed).
    p0 = 1.0 / (1.0 + jnp.exp(l1 - l0))
    p1 = 1.0 - p0

    # Assemble one lane-dense output tile and store it with a single full-width write.
    col = lax.broadcasted_iota(jnp.int32, out_ref.shape, 1)
    out = jnp.where(col == 0, p0,
          jnp.where(col == 1, p1,
          jnp.where(col == 2, v, 0.0)))
    out_ref[...] = out.astype(out_ref.dtype)


@functools.partial(jax.jit, static_argnames=("tile_b",))
def policy_forward(x, w1, w_heads, b_packed, *, tile_b=128):
    """x: (B, D_obs) f32.  w1: (D_obs, 128).  w_heads: (128, 128) fused.  b_packed: (2, 128)."""
    B, D = x.shape
    tb = min(tile_b, _round_up(B, 8))
    Bp = _round_up(B, tb)
    if Bp != B:
        x = jnp.pad(x, ((0, Bp - B), (0, 0)))

    grid = (Bp // tb,)
    flops = 2 * Bp * D * HIDDEN + 2 * Bp * HIDDEN * HEAD_PAD
    bytes_accessed = 4 * (Bp * D + D * HIDDEN + HIDDEN * HEAD_PAD
                          + 2 * HEAD_PAD + Bp * HEAD_PAD)

    out = pl.pallas_call(
        policy_kernel,
        out_shape=jax.ShapeDtypeStruct((Bp, HEAD_PAD), jnp.float32),
        grid=grid,
        in_specs=[
            pl.BlockSpec((tb, D), lambda i: (i, 0)),            # x: streams over batch
            pl.BlockSpec((D, HIDDEN), lambda i: (0, 0)),        # w1: VMEM-resident
            pl.BlockSpec((HIDDEN, HEAD_PAD), lambda i: (0, 0)), # fused head weight: resident
            pl.BlockSpec((2, HEAD_PAD), lambda i: (0, 0)),      # packed biases: resident
        ],
        out_specs=pl.BlockSpec((tb, HEAD_PAD), lambda i: (i, 0)),
        compiler_params=pltpu.CompilerParams(dimension_semantics=("parallel",)),
        cost_estimate=pl.CostEstimate(
            flops=flops, transcendentals=Bp, bytes_accessed=bytes_accessed),
    )(x, w1, w_heads, b_packed)

    action_prob = out[:B, 0:2]
    state_values = out[:B, 2:3]
    return action_prob, state_values


def init_params(key, obs_dim, hidden=HIDDEN):
    """Deterministic synthetic parameters in PyTorch-Linear math layout (pre-transposed)."""
    k1, k2, k3, k4, k5, k6 = jax.random.split(key, 6)
    w1 = jax.random.normal(k1, (obs_dim, hidden), jnp.float32) * 0.1   # affine1
    b1 = jax.random.normal(k2, (hidden,), jnp.float32) * 0.1
    wa = jax.random.normal(k3, (hidden, 2), jnp.float32) * 0.1         # action_head
    ba = jax.random.normal(k4, (2,), jnp.float32) * 0.1
    wv = jax.random.normal(k5, (hidden, 1), jnp.float32) * 0.1         # value_head
    bv = jax.random.normal(k6, (1,), jnp.float32) * 0.1
    return w1, b1, wa, ba, wv, bv


def pack_params(w1, b1, wa, ba, wv, bv):
    """One-time (wrapper-side) packing: fuse the two heads into a lane-dense (128, 128)
    weight and stack all biases into a single (2, 128) tile."""
    hidden = w1.shape[1]
    w_heads = jnp.zeros((hidden, HEAD_PAD), jnp.float32)
    w_heads = w_heads.at[:, 0:2].set(wa).at[:, 2:3].set(wv)
    b_packed = jnp.zeros((2, HEAD_PAD), jnp.float32)
    b_packed = b_packed.at[0, :HIDDEN].set(b1).at[1, 0:2].set(ba).at[1, 2].set(bv[0])
    return w1, w_heads, b_packed


if __name__ == "__main__":
    key = jax.random.PRNGKey(0)
    kx, kp = jax.random.split(key)

    B = 256        # batched observations (amortizes launch cost; grid of 2 batch tiles)
    OBS_DIM = 11   # CustomHopper observation dimension

    x = jax.random.normal(kx, (B, OBS_DIM), jnp.float32)
    w1, b1, wa, ba, wv, bv = init_params(kp, OBS_DIM)
    packed = pack_params(w1, b1, wa, ba, wv, bv)

    action_prob, state_values = policy_forward(x, *packed)
    jax.block_until_ready((action_prob, state_values))

    # Pure-JAX reference of the same forward (unfused params).
    h_ref = jnp.maximum(x @ w1 + b1, 0.0)
    ap_ref = jax.nn.softmax(h_ref @ wa + ba, axis=-1)
    sv_ref = h_ref @ wv + bv
    assert action_prob.shape == (B, 2) and state_values.shape == (B, 1)
    assert jnp.allclose(action_prob, ap_ref, atol=1e-5), "action_prob mismatch"
    assert jnp.allclose(state_values, sv_ref, atol=1e-5), "state_values mismatch"

    print("KERNEL_OK")
</pallas_src>

<mosaic_0001>
module attributes {stable_mosaic.version = 11 : i64} {
  func.func @policy_kernel(%arg0: i32, %arg1: memref<128x11xf32, #tpu.memory_space<vmem>>, %arg2: memref<11x128xf32, #tpu.memory_space<vmem>>, %arg3: memref<128x128xf32, #tpu.memory_space<vmem>>, %arg4: memref<2x128xf32, #tpu.memory_space<vmem>>, %arg5: memref<128x128xf32, #tpu.memory_space<vmem>>) attributes {dimension_semantics = [#tpu.dimension_semantics<parallel>], iteration_bounds = array<i64: 2>, scalar_prefetch = 0 : i64, scratch_operands = 0 : i64, tpu.core_type = #tpu.core_type<tc>, window_params = [{transform_indices = @transform_0, window_bounds = array<i64: 128, 11>}, {pipeline_mode = #tpu.pipeline_mode<synchronous>, transform_indices = @transform_1, window_bounds = array<i64: 11, 128>}, {pipeline_mode = #tpu.pipeline_mode<synchronous>, transform_indices = @transform_2, window_bounds = array<i64: 128, 128>}, {pipeline_mode = #tpu.pipeline_mode<synchronous>, transform_indices = @transform_3, window_bounds = array<i64: 2, 128>}, {transform_indices = @transform_4, window_bounds = array<i64: 128, 128>}]} {
    %c0 = arith.constant 0 : index
    %c0_0 = arith.constant 0 : index
    %0 = vector.load %arg1[%c0, %c0_0] : memref<128x11xf32, #tpu.memory_space<vmem>>, vector<128x11xf32>
    %c0_1 = arith.constant 0 : index
    %c0_2 = arith.constant 0 : index
    %1 = vector.load %arg2[%c0_1, %c0_2] : memref<11x128xf32, #tpu.memory_space<vmem>>, vector<11x128xf32>
    %cst = arith.constant dense<0.000000e+00> : vector<128x128xf32>
    %2 = tpu.matmul %0, %1, %cst {dimension_numbers = #tpu.dot_dimension_numbers<[1], [0], [0], [1], [0, 0, 1, 1], [], []>} : vector<128x11xf32>, vector<11x128xf32>, vector<128x128xf32> -> vector<128x128xf32>
    %c0_3 = arith.constant 0 : index
    %c0_4 = arith.constant 0 : index
    %3 = vector.load %arg4[%c0_3, %c0_4] : memref<2x128xf32, #tpu.memory_space<vmem>>, vector<1x128xf32>
    %4 = vector.broadcast %3 : vector<1x128xf32> to vector<128x128xf32>
    %5 = arith.addf %2, %4 : vector<128x128xf32>
    %cst_5 = arith.constant 0.000000e+00 : f32
    %6 = vector.broadcast %cst_5 : f32 to vector<128x128xf32>
    %7 = arith.maximumf %5, %6 : vector<128x128xf32>
    %c0_6 = arith.constant 0 : index
    %c0_7 = arith.constant 0 : index
    %8 = vector.load %arg3[%c0_6, %c0_7] : memref<128x128xf32, #tpu.memory_space<vmem>>, vector<128x128xf32>
    %cst_8 = arith.constant dense<0.000000e+00> : vector<128x128xf32>
    %9 = tpu.matmul %7, %8, %cst_8 {dimension_numbers = #tpu.dot_dimension_numbers<[1], [0], [0], [1], [0, 0, 1, 1], [], []>} : vector<128x128xf32>, vector<128x128xf32>, vector<128x128xf32> -> vector<128x128xf32>
    %c1 = arith.constant 1 : index
    %c0_9 = arith.constant 0 : index
    %10 = vector.load %arg4[%c1, %c0_9] : memref<2x128xf32, #tpu.memory_space<vmem>>, vector<1x128xf32>
    %11 = vector.broadcast %10 : vector<1x128xf32> to vector<128x128xf32>
    %12 = arith.addf %9, %11 : vector<128x128xf32>
    %13 = vector.extract_strided_slice %12 {offsets = [0, 0], sizes = [128, 1], strides = [1, 1]} : vector<128x128xf32> to vector<128x1xf32>
    %14 = vector.extract_strided_slice %12 {offsets = [0, 1], sizes = [128, 1], strides = [1, 1]} : vector<128x128xf32> to vector<128x1xf32>
    %15 = vector.extract_strided_slice %12 {offsets = [0, 2], sizes = [128, 1], strides = [1, 1]} : vector<128x128xf32> to vector<128x1xf32>
    %16 = arith.subf %14, %13 : vector<128x1xf32>
    %17 = math.exp %16 : vector<128x1xf32>
    %cst_10 = arith.constant 1.000000e+00 : f32
    %18 = vector.broadcast %cst_10 : f32 to vector<128x1xf32>
    %19 = arith.addf %18, %17 : vector<128x1xf32>
    %cst_11 = arith.constant 1.000000e+00 : f32
    %20 = vector.broadcast %cst_11 : f32 to vector<128x1xf32>
    %21 = arith.divf %20, %19 : vector<128x1xf32>
    %cst_12 = arith.constant 1.000000e+00 : f32
    %22 = vector.broadcast %cst_12 : f32 to vector<128x1xf32>
    %23 = arith.subf %22, %21 : vector<128x1xf32>
    %24 = tpu.iota {dimensions = array<i32: 1>} : vector<128x128xi32>
    %c0_i32 = arith.constant 0 : i32
    %25 = vector.broadcast %c0_i32 : i32 to vector<128x128xi32>
    %26 = arith.cmpi eq, %24, %25 : vector<128x128xi32>
    %c1_i32 = arith.constant 1 : i32
    %27 = vector.broadcast %c1_i32 : i32 to vector<128x128xi32>
    %28 = arith.cmpi eq, %24, %27 : vector<128x128xi32>
    %c2_i32 = arith.constant 2 : i32
    %29 = vector.broadcast %c2_i32 : i32 to vector<128x128xi32>
    %30 = arith.cmpi eq, %24, %29 : vector<128x128xi32>
    %cst_13 = arith.constant 0.000000e+00 : f32
    %31 = vector.shape_cast %15 : vector<128x1xf32> to vector<128x1xf32>
    %32 = vector.broadcast %31 : vector<128x1xf32> to vector<128x128xf32>
    %33 = vector.broadcast %cst_13 : f32 to vector<128x128xf32>
    %34 = arith.select %30, %32, %33 : vector<128x128xi1>, vector<128x128xf32>
    %35 = vector.shape_cast %23 : vector<128x1xf32> to vector<128x1xf32>
    %36 = vector.broadcast %35 : vector<128x1xf32> to vector<128x128xf32>
    %37 = arith.select %28, %36, %34 : vector<128x128xi1>, vector<128x128xf32>
    %38 = vector.shape_cast %21 : vector<128x1xf32> to vector<128x1xf32>
    %39 = vector.broadcast %38 : vector<128x1xf32> to vector<128x128xf32>
    %40 = arith.select %26, %39, %37 : vector<128x128xi1>, vector<128x128xf32>
    %c0_14 = arith.constant 0 : index
    %c0_15 = arith.constant 0 : index
    %41 = vector.load %arg5[%c0_14, %c0_15] : memref<128x128xf32, #tpu.memory_space<vmem>>, vector<128x128xf32>
    tpu.vector_store %arg5[%c0_14, %c0_15], %40 {strides = array<i32>} : memref<128x128xf32, #tpu.memory_space<vmem>>, vector<128x128xf32>,
    return
  }
  func.func @transform_0(%arg0: i32) -> (i32, i32) {
    %c0_i32 = arith.constant 0 : i32
    %c0_i32_0 = arith.constant 0 : i32
    return %arg0, %c0_i32 : i32, i32
  }
  func.func @transform_1(%arg0: i32) -> (i32, i32) {
    %c0_i32 = arith.constant 0 : i32
    %c0_i32_0 = arith.constant 0 : i32
    %c0_i32_1 = arith.constant 0 : i32
    return %c0_i32, %c0_i32_0 : i32, i32
  }
  func.func @transform_2(%arg0: i32) -> (i32, i32) {
    %c0_i32 = arith.constant 0 : i32
    %c0_i32_0 = arith.constant 0 : i32
    %c0_i32_1 = arith.constant 0 : i32
    return %c0_i32, %c0_i32_0 : i32, i32
  }
  func.func @transform_3(%arg0: i32) -> (i32, i32) {
    %c0_i32 = arith.constant 0 : i32
    %c0_i32_0 = arith.constant 0 : i32
    %c0_i32_1 = arith.constant 0 : i32
    return %c0_i32, %c0_i32_0 : i32, i32
  }
  func.func @transform_4(%arg0: i32) -> (i32, i32) {
    %c0_i32 = arith.constant 0 : i32
    %c0_i32_0 = arith.constant 0 : i32
    return %arg0, %c0_i32 : i32, i32
  }
}

</mosaic_0001>

<llo_original>
// kernel: policy_forward.1
$region0: #{policy_forward.1}
  #allocation0 [shape = 'u32[]', space=smem, size = 0x4, offset = 0x4, fixed_abs, tag = 'smem constant byte address 0x4 - core index']
  #allocation1 [shape = 'u32[144,128]{1,0:T(1,128)}', space=vmem, size = 0x12000, scoped, tag = 'internal scratch']
  %s0 = inlined_call_operand.vmem [shape: f32[256,11], index: 0, kind: input, shape index: {}]
  %s1 = inlined_call_operand.vmem [shape: f32[11,128], index: 1, kind: input, shape index: {}]
  %s2 = inlined_call_operand.vmem [shape: f32[128,128], index: 2, kind: input, shape index: {}]
  %s3 = inlined_call_operand.vmem [shape: f32[2,128], index: 3, kind: input, shape index: {}]
  %s4 = inlined_call_operand.vmem [shape: f32[256,128], index: 4, kind: output, shape index: {}]
  %s5 = sld [smem:[#allocation0]]
  $region49: #{policy_forward.1} parent=0
    _
  %s7 = ssub.s32 1, %s5
  %s8 = scalar_select 0, %s7, %s5
  loop: start=0, step=1, limit=4
  $region2: #{policy_forward.1} parent=0 // loop_pre_header
    _
  $region3: #{policy_forward.1} parent=0 // loop_header
    %s10 = sphi 0, %s14
    %p11 = scmp.ge.s32.totalorder %s10, 4
    %s20 = sphi 0, %s22
    %s23 = sphi 0, %s20
    %s24 = sphi 0, %s23
    %s40 = sphi 0, %s24
    %s44 = sphi 0, %s44
    %s46 = sphi 0, %s44
    %s47 = sphi 0, %s46
    %s61 = sphi 0, %s47
    %s65 = sphi 0, %s65
    %s67 = sphi 0, %s65
    %s68 = sphi 0, %s67
    %s82 = sphi 0, %s68
    %s86 = sphi 0, %s86
    %s88 = sphi 0, %s86
    %s89 = sphi 0, %s88
    %s103 = sphi 0, %s89
    %s109 = sphi 0, %s111
    %s112 = sphi 0, %s109
    %s113 = sphi 0, %s112
    %s129 = sphi 0, %s113
  $region4: #{policy_forward.1} parent=0 // loop_header_branch
    %13 = sbr.rel (%p11) target = $region8
  $region5: #{policy_forward.1} parent=0 // loop_body
    %s15 = ssub.s32 %s10, 1
    %s16 = ssub.s32 %s10, 2
    %s17 = sadd.s32 %s10, 1
    %s18 = ssub.s32 %s10, %s17
    %p19 = scmp.eq.s32.totalorder %s18, 0
    %s21 = sadd.s32 %s20, 1
    %s22 = scalar_select %p19, %s20, %s21
    %p25 = pneg %p19
    %p26 = scmp.eq.s32.totalorder %s10, 1
    %p27 = por %p25, %p26
    %p28 = scmp.ne.s32.totalorder %s20, %s23
    %p29 = scmp.eq.s32.totalorder %s10, 0
    %p30 = por %p28, %p29
    %p31 = scmp.ne.s32.totalorder %s20, %s23
    %p32 = scmp.eq.s32.totalorder %s15, 1
    %p33 = por %p31, %p32
    %p34 = scmp.ne.s32.totalorder %s23, %s24
    %p35 = scmp.eq.s32.totalorder %s15, 0
    %p36 = por %p34, %p35
    %p37 = scmp.ne.s32.totalorder %s23, %s24
    %p38 = scmp.eq.s32.totalorder %s16, 1
    %p39 = por %p37, %p38
    %p41 = scmp.ne.s32.totalorder %s24, %s40
    %p42 = scmp.eq.s32.totalorder %s16, 0
    %p43 = por %p41, %p42
    %s45 = sadd.s32 %s44, 1
    %p48 = scmp.eq.s32.totalorder %s10, 1
    %p49 = scmp.ne.s32.totalorder %s44, %s46
    %p50 = scmp.eq.s32.totalorder %s10, 0
    %p51 = por %p49, %p50
    %p52 = scmp.ne.s32.totalorder %s44, %s46
    %p53 = scmp.eq.s32.totalorder %s15, 1
    %p54 = por %p52, %p53
    %p55 = scmp.ne.s32.totalorder %s46, %s47
    %p56 = scmp.eq.s32.totalorder %s15, 0
    %p57 = por %p55, %p56
    %p58 = scmp.ne.s32.totalorder %s46, %s47
    %p59 = scmp.eq.s32.totalorder %s16, 1
    %p60 = por %p58, %p59
    %p62 = scmp.ne.s32.totalorder %s47, %s61
    %p63 = scmp.eq.s32.totalorder %s16, 0
    %p64 = por %p62, %p63
    %s66 = sadd.s32 %s65, 1
    %p69 = scmp.eq.s32.totalorder %s10, 1
    %p70 = scmp.ne.s32.totalorder %s65, %s67
    %p71 = scmp.eq.s32.totalorder %s10, 0
    %p72 = por %p70, %p71
    %p73 = scmp.ne.s32.totalorder %s65, %s67
    %p74 = scmp.eq.s32.totalorder %s15, 1
    %p75 = por %p73, %p74
    %p76 = scmp.ne.s32.totalorder %s67, %s68
    %p77 = scmp.eq.s32.totalorder %s15, 0
    %p78 = por %p76, %p77
    %p79 = scmp.ne.s32.totalorder %s67, %s68
    %p80 = scmp.eq.s32.totalorder %s16, 1
    %p81 = por %p79, %p80
    %p83 = scmp.ne.s32.totalorder %s68, %s82
    %p84 = scmp.eq.s32.totalorder %s16, 0
    %p85 = por %p83, %p84
    %s87 = sadd.s32 %s86, 1
    %p90 = scmp.eq.s32.totalorder %s10, 1
    %p91 = scmp.ne.s32.totalorder %s86, %s88
    %p92 = scmp.eq.s32.totalorder %s10, 0
    %p93 = por %p91, %p92
    %p94 = scmp.ne.s32.totalorder %s86, %s88
    %p95 = scmp.eq.s32.totalorder %s15, 1
    %p96 = por %p94, %p95
    %p97 = scmp.ne.s32.totalorder %s88, %s89
    %p98 = scmp.eq.s32.totalorder %s15, 0
    %p99 = por %p97, %p98
    %p100 = scmp.ne.s32.totalorder %s88, %s89
    %p101 = scmp.eq.s32.totalorder %s16, 1
    %p102 = por %p100, %p101
    %p104 = scmp.ne.s32.totalorder %s89, %s103
    %p105 = scmp.eq.s32.totalorder %s16, 0
    %p106 = por %p104, %p105
    %s107 = ssub.s32 %s10, %s17
    %p108 = scmp.eq.s32.totalorder %s107, 0
    %s110 = sadd.s32 %s109, 1
    %s111 = scalar_select %p108, %s109, %s110
    %p114 = pneg %p108
    %p115 = scmp.eq.s32.totalorder %s10, 1
    %p116 = por %p114, %p115
    %p117 = scmp.ne.s32.totalorder %s109, %s112
    %p118 = scmp.eq.s32.totalorder %s10, 0
    %p119 = por %p117, %p118
    %p120 = scmp.ne.s32.totalorder %s109, %s112
    %p121 = scmp.eq.s32.totalorder %s15, 1
    %p122 = por %p120, %p121
    %p123 = scmp.ne.s32.totalorder %s112, %s113
    %p124 = scmp.eq.s32.totalorder %s15, 0
    %p125 = por %p123, %p124
    %p126 = scmp.ne.s32.totalorder %s112, %s113
    %p127 = scmp.eq.s32.totalorder %s16, 1
    %p128 = por %p126, %p127
    %p130 = scmp.ne.s32.totalorder %s113, %s129
    %p131 = scmp.eq.s32.totalorder %s16, 0
    %p132 = por %p130, %p131
    %p133 = scmp.le.s32.totalorder 1, %s10
    %p134 = scmp.lt.s32.totalorder %s10, 3
    %p135 = pnand %p133, %p134
    %p136 = pneg %p135
    // Predicated region
    $region9: #{policy_forward.1} parent=5 // pred_check
      _
    $region10: #{policy_forward.1} parent=5 // pred_check_branch
      %138 = sbr.rel (%p135) target = $region12
    $region11: #{policy_forward.1} parent=5 // pred_region
      %s139 = ssub.s32 %s10, 1
      // Predicated region
      $region13: #{policy_forward.1} parent=11 // pred_check
        %p140 = pneg %p57
      $region14: #{policy_forward.1} parent=11 // pred_check_branch
        %142 = sbr.rel (%p140) target = $region16
      $region15: #{policy_forward.1} parent=11 // pred_region
        _
      $region16: #{policy_forward.1} parent=11 // pred_fallthru
        _
      // Predicated region
      $region17: #{policy_forward.1} parent=11 // pred_check
        %p143 = pneg %p78
      $region18: #{policy_forward.1} parent=11 // pred_check_branch
        %145 = sbr.rel (%p143) target = $region20
      $region19: #{policy_forward.1} parent=11 // pred_region
        _
      $region20: #{policy_forward.1} parent=11 // pred_fallthru
        _
      // Predicated region
      $region21: #{policy_forward.1} parent=11 // pred_check
        %p146 = pneg %p99
      $region22: #{policy_forward.1} parent=11 // pred_check_branch
        %148 = sbr.rel (%p146) target = $region24
      $region23: #{policy_forward.1} parent=11 // pred_region
        _
      $region24: #{policy_forward.1} parent=11 // pred_fallthru
        _
    $region12: #{policy_forward.1} parent=5 // pred_fallthru
      _
    %p149 = scmp.lt.s32.totalorder %s10, 2
    // Predicated region
    $region25: #{policy_forward.1} parent=5 // pred_check
      %p150 = pneg %p149
    $region26: #{policy_forward.1} parent=5 // pred_check_branch
      %152 = sbr.rel (%p150) target = $region28
    $region27: #{policy_forward.1} parent=5 // pred_region
      // Predicated region
      $region29: #{policy_forward.1} parent=27 // pred_check
        %p153 = pneg %p30
      $region30: #{policy_forward.1} parent=27 // pred_check_branch
        %155 = sbr.rel (%p153) target = $region32
      $region31: #{policy_forward.1} parent=27 // pred_region
        %s156 = smul.u32 16, %s10
        %p157 = scmp.lt.s32.totalorder %s156, 31
        %s158 = scalar_select %p157, %s156, 31
        %s159 = smul.addr %s158, 8
        %s160 = scalar_lea.vmem %s0, %s159
        %s161 = smul.u32 16, %s10
      $region32: #{policy_forward.1} parent=27 // pred_fallthru
        _
    $region28: #{policy_forward.1} parent=5 // pred_fallthru
      _
    %p162 = scmp.le.s32.totalorder 1, %s10
    %p163 = scmp.lt.s32.totalorder %s10, 3
    %p164 = pnand %p162, %p163
    %p165 = pneg %p164
    // Predicated region
    $region33: #{policy_forward.1} parent=5 // pred_check
      _
    $region34: #{policy_forward.1} parent=5 // pred_check_branch
      %167 = sbr.rel (%p164) target = $region36
    $region35: #{policy_forward.1} parent=5 // pred_region
      %s168 = ssub.s32 %s10, 1
      %s169 = smul.u32 16, %s15
      %p170 = scmp.lt.s32.totalorder %s169, 31
      %s171 = scalar_select %p170, %s169, 31
      %s172 = smul.addr %s171, 8
      %s173 = scalar_lea.vmem %s0, %s172
      %p174 = pneg %p36
      %p175 = pneg %p33
      %p176 = pneg %p57
      %p177 = pneg %p54
      %p178 = pneg %p78
      %p179 = pneg %p75
      %p180 = pneg %p99
      %p181 = pneg %p96
      %p182 = pneg %p125
      %p183 = pneg %p122
      %s184 = smul.u32 16, %s15
      %p185 = scmp.lt.s32.totalorder %s184, 31
      %s186 = scalar_select %p185, %s184, 31
      %s187 = smul.addr %s186, 8
      %s188 = scalar_lea.vmem %s4, %s187
      %s189 = smul.u32 16, %s15
      %p190 = scmp.lt.s32.totalorder %s189, 31
      %s191 = scalar_select %p190, %s189, 31
      %s192 = smul.addr %s191, 8
      %s193 = scalar_lea.vmem %s0, %s192
      %s194 = smul.u32 16, %s15
      %s195 = smul.u32 16, %s15
      %p196 = scmp.lt.s32.totalorder %s195, 31
      %s197 = scalar_select %p196, %s195, 31
      %s198 = smul.addr %s197, 8
      %s199 = scalar_lea.vmem %s4, %s198
      %s200 = smul.u32 16, %s15
      %v201 = vld [vmem:[%s193] sm:$0xff]
      %v202 = vld [vmem:[%s193 + $0x8] sm:$0xff]
      %v203 = vld [vmem:[%s193 + $0x10] sm:$0xff]
      %v204 = vld [vmem:[%s193 + $0x18] sm:$0xff]
      %v205 = vld [vmem:[%s193 + $0x20] sm:$0xff]
      %v206 = vld [vmem:[%s193 + $0x28] sm:$0xff]
      %v207 = vld [vmem:[%s193 + $0x30] sm:$0xff]
      %v208 = vld [vmem:[%s193 + $0x38] sm:$0xff]
      %v209 = vld [vmem:[%s193 + $0x40] sm:$0xff]
      %v210 = vld [vmem:[%s193 + $0x48] sm:$0xff]
      %v211 = vld [vmem:[%s193 + $0x50] sm:$0xff]
      %v212 = vld [vmem:[%s193 + $0x58] sm:$0xff]
      %v213 = vld [vmem:[%s193 + $0x60] sm:$0xff]
      %v214 = vld [vmem:[%s193 + $0x68] sm:$0xff]
      %v215 = vld [vmem:[%s193 + $0x70] sm:$0xff]
      %v216 = vld [vmem:[%s193 + $0x78] sm:$0xff]
      %v217 = vld [vmem:[%s1] sm:$0xff]
      %v218 = vld [vmem:[%s1 + $0x8] sm:$0x7]
      %v219 = vld [vmem:[%s3] sm:$0x1]
      %v220 = vlaneseq
      %v221 = vshrl.u32 %v220, 7
      %v222 = vsub.s32 0, %v221
      %v223 = vrot.slane %v219, %v222
      %vm224 = vcmask 89088
      %v226 = vsel %vm224, %v201, 0
      %v229 = vsel %vm224, %v202, 0
      %v232 = vsel %vm224, %v203, 0
      %v235 = vsel %vm224, %v204, 0
      %v238 = vsel %vm224, %v205, 0
      %v241 = vsel %vm224, %v206, 0
      %v244 = vsel %vm224, %v207, 0
      %v247 = vsel %vm224, %v208, 0
      %v250 = vsel %vm224, %v209, 0
      %v253 = vsel %vm224, %v210, 0
      %v256 = vsel %vm224, %v211, 0
      %v259 = vsel %vm224, %v212, 0
      %v262 = vsel %vm224, %v213, 0
      %v265 = vsel %vm224, %v214, 0
      %v268 = vsel %vm224, %v215, 0
      %v271 = vsel %vm224, %v216, 0
      %vm273 = vcmask 1042432
      %v275 = vsel %vm273, %v218, 0
      %277 = vmatprep.subr.mxu0 0.0
      %278 = vmatpush1.msra.mxu0 0.0
      %279 = vmatprep.subr.mxu0 0.0
      %280 = vmatpush1.msra.mxu0 0.0
      %281 = vmatprep.subr.mxu0 0.0
      %282 = vmatpush1.msra.mxu0 0.0
      %283 = vmatprep.subr.mxu0 0.0
      %284 = vmatpush1.msra.mxu0 0.0
      %285 = vmatprep.subr.mxu0 0.0
      %286 = vmatpush1.msra.mxu0 0.0
      %287 = vmatprep.subr.mxu0 0.0
      %288 = vmatpush1.msra.mxu0 0.0
      %289 = vmatprep.subr.mxu0 0.0
      %290 = vmatpush1.msra.mxu0 0.0
      %291 = vmatprep.subr.mxu0 0.0
      %292 = vmatpush1.msra.mxu0 0.0
      %293 = vmatprep.subr.mxu0 0.0
      %294 = vmatpush1.msra.mxu0 0.0
      %295 = vmatprep.subr.mxu0 0.0
      %296 = vmatpush1.msra.mxu0 0.0
      %297 = vmatprep.subr.mxu0 0.0
      %298 = vmatpush1.msra.mxu0 0.0
      %299 = vmatprep.subr.mxu0 0.0
      %300 = vmatpush1.msra.mxu0 0.0
      %301 = vmatprep.subr.mxu0 0.0
      %302 = vmatpush1.msra.mxu0 0.0
      %303 = vmatprep.subr.mxu0 0.0
      %304 = vmatpush1.msra.mxu0 0.0
      %305 = vmatprep.subr.mxu0 0.0
      %306 = vmatpush1.msra.mxu0 %v275
      %307 = vmatprep.subr.mxu0 0.0
      %308 = vmatpush1.msra.mxu0 %v217
      %309 = vmatprep.subr.mxu0 0.0
      %310 = vmatpush2.msra.mxu0 0.0
      %311 = vmatprep.subr.mxu0 0.0
      %312 = vmatpush2.msra.mxu0 0.0
      %313 = vmatprep.subr.mxu0 0.0
      %314 = vmatpush2.msra.mxu0 0.0
      %315 = vmatprep.subr.mxu0 0.0
      %316 = vmatpush2.msra.mxu0 0.0
      %317 = vmatprep.subr.mxu0 0.0
      %318 = vmatpush2.msra.mxu0 0.0
      %319 = vmatprep.subr.mxu0 0.0
      %320 = vmatpush2.msra.mxu0 0.0
      %321 = vmatprep.subr.mxu0 0.0
      %322 = vmatpush2.msra.mxu0 0.0
      %323 = vmatprep.subr.mxu0 0.0
      %324 = vmatpush2.msra.mxu0 0.0
      %325 = vmatprep.subr.mxu0 0.0
      %326 = vmatpush2.msra.mxu0 0.0
      %327 = vmatprep.subr.mxu0 0.0
      %328 = vmatpush2.msra.mxu0 0.0
      %329 = vmatprep.subr.mxu0 0.0
      %330 = vmatpush2.msra.mxu0 0.0
      %331 = vmatprep.subr.mxu0 0.0
      %332 = vmatpush2.msra.mxu0 0.0
      %333 = vmatprep.subr.mxu0 0.0
      %334 = vmatpush2.msra.mxu0 0.0
      %335 = vmatprep.subr.mxu0 0.0
      %336 = vmatpush2.msra.mxu0 0.0
      %337 = vmatprep.subr.mxu0 0.0
      %338 = vmatpush2.msra.mxu0 0.0
      %339 = vmatprep.subr.mxu0 0.0
      %340 = vmatpush2.msra.mxu0 0.0
      %341 = vmatprep.mubr.f32.mxu0 0.0
      %342 = vmatmul.mubr.f32.gmra.mxu0 %v226
      %v343 = vpop.f32.mrf.mxu0
      %v344 = vadd.f32 %v223, %v343
      %v345 = vpop.f32.mrf.mxu0
      %346 = vmatprep.mubr.f32.mxu0 0.0
      %347 = vmatmul.mubr.f32.gmra.mxu0 %v229
      %v348 = vpop.f32.mrf.mxu0
      %v349 = vadd.f32 %v223, %v348
      %v350 = vpop.f32.mrf.mxu0
      %351 = vmatprep.mubr.f32.mxu0 0.0
      %352 = vmatmul.mubr.f32.gmra.mxu0 %v232
      %v353 = vpop.f32.mrf.mxu0
      %v354 = vadd.f32 %v223, %v353
      %v355 = vpop.f32.mrf.mxu0
      %356 = vmatprep.mubr.f32.mxu0 0.0
      %357 = vmatmul.mubr.f32.gmra.mxu0 %v235
      %v358 = vpop.f32.mrf.mxu0
      %v359 = vadd.f32 %v223, %v358
      %v360 = vpop.f32.mrf.mxu0
      %361 = vmatprep.mubr.f32.mxu0 0.0
      %362 = vmatmul.mubr.f32.gmra.mxu0 %v238
      %v363 = vpop.f32.mrf.mxu0
      %v364 = vadd.f32 %v223, %v363
      %v365 = vpop.f32.mrf.mxu0
      %366 = vmatprep.mubr.f32.mxu0 0.0
      %367 = vmatmul.mubr.f32.gmra.mxu0 %v241
      %v368 = vpop.f32.mrf.mxu0
      %v369 = vadd.f32 %v223, %v368
      %v370 = vpop.f32.mrf.mxu0
      %371 = vmatprep.mubr.f32.mxu0 0.0
      %372 = vmatmul.mubr.f32.gmra.mxu0 %v244
      %v373 = vpop.f32.mrf.mxu0
      %v374 = vadd.f32 %v223, %v373
      %v375 = vpop.f32.mrf.mxu0
      %376 = vmatprep.mubr.f32.mxu0 0.0
      %377 = vmatmul.mubr.f32.gmra.mxu0 %v247
      %v378 = vpop.f32.mrf.mxu0
      %v379 = vadd.f32 %v223, %v378
      %v380 = vpop.f32.mrf.mxu0
      %381 = vmatprep.mubr.f32.mxu0 0.0
      %382 = vmatmul.mubr.f32.gmra.mxu0 %v250
      %v383 = vpop.f32.mrf.mxu0
      %v384 = vadd.f32 %v223, %v383
      %v385 = vpop.f32.mrf.mxu0
      %386 = vmatprep.mubr.f32.mxu0 0.0
      %387 = vmatmul.mubr.f32.gmra.mxu0 %v253
      %v388 = vpop.f32.mrf.mxu0
      %v389 = vadd.f32 %v223, %v388
      %v390 = vpop.f32.mrf.mxu0
      %391 = vmatprep.mubr.f32.mxu0 0.0
      %392 = vmatmul.mubr.f32.gmra.mxu0 %v256
      %v393 = vpop.f32.mrf.mxu0
      %v394 = vadd.f32 %v223, %v393
      %v395 = vpop.f32.mrf.mxu0
      %396 = vmatprep.mubr.f32.mxu0 0.0
      %397 = vmatmul.mubr.f32.gmra.mxu0 %v259
      %v398 = vpop.f32.mrf.mxu0
      %v399 = vadd.f32 %v223, %v398
      %v400 = vpop.f32.mrf.mxu0
      %401 = vmatprep.mubr.f32.mxu0 0.0
      %402 = vmatmul.mubr.f32.gmra.mxu0 %v262
      %v403 = vpop.f32.mrf.mxu0
      %v404 = vadd.f32 %v223, %v403
      %v405 = vpop.f32.mrf.mxu0
      %406 = vmatprep.mubr.f32.mxu0 0.0
      %407 = vmatmul.mubr.f32.gmra.mxu0 %v265
      %v408 = vpop.f32.mrf.mxu0
      %v409 = vadd.f32 %v223, %v408
      %v410 = vpop.f32.mrf.mxu0
      %411 = vmatprep.mubr.f32.mxu0 0.0
      %412 = vmatmul.mubr.f32.gmra.mxu0 %v268
      %v413 = vpop.f32.mrf.mxu0
      %v414 = vadd.f32 %v223, %v413
      %v415 = vpop.f32.mrf.mxu0
      %416 = vmatprep.mubr.f32.mxu0 0.0
      %417 = vmatmul.mubr.f32.gmra.mxu0 %v271
      %v418 = vpop.f32.mrf.mxu0
      %v419 = vadd.f32 %v223, %v418
      %v420 = vpop.f32.mrf.mxu0
      %421 = vdwg.mxu0
      %v422 = vmax.f32 %v344, 0.0
      %v423 = vmax.f32 %v349, 0.0
      %v424 = vmax.f32 %v354, 0.0
      %v425 = vmax.f32 %v359, 0.0
      %v426 = vmax.f32 %v364, 0.0
      %v427 = vmax.f32 %v369, 0.0
      %v428 = vmax.f32 %v374, 0.0
      %v429 = vmax.f32 %v379, 0.0
      %v430 = vmax.f32 %v384, 0.0
      %v431 = vmax.f32 %v389, 0.0
      %v432 = vmax.f32 %v394, 0.0
      %v433 = vmax.f32 %v399, 0.0
      %v434 = vmax.f32 %v404, 0.0
      %v435 = vmax.f32 %v409, 0.0
      %v436 = vmax.f32 %v414, 0.0
      %v437 = vmax.f32 %v419, 0.0
      %v438 = vld [vmem:[%s2] sm:$0xff]
      %v439 = vld [vmem:[%s2 + $0x8] sm:$0xff]
      %v440 = vld [vmem:[%s2 + $0x10] sm:$0xff]
      %v441 = vld [vmem:[%s2 + $0x18] sm:$0xff]
      %v442 = vld [vmem:[%s2 + $0x20] sm:$0xff]
      %v443 = vld [vmem:[%s2 + $0x28] sm:$0xff]
      %v444 = vld [vmem:[%s2 + $0x30] sm:$0xff]
      %v445 = vld [vmem:[%s2 + $0x38] sm:$0xff]
      %v446 = vld [vmem:[%s2 + $0x40] sm:$0xff]
      %v447 = vld [vmem:[%s2 + $0x48] sm:$0xff]
      %v448 = vld [vmem:[%s2 + $0x50] sm:$0xff]
      %v449 = vld [vmem:[%s2 + $0x58] sm:$0xff]
      %v450 = vld [vmem:[%s2 + $0x60] sm:$0xff]
      %v451 = vld [vmem:[%s2 + $0x68] sm:$0xff]
      %v452 = vld [vmem:[%s2 + $0x70] sm:$0xff]
      %v453 = vld [vmem:[%s2 + $0x78] sm:$0xff]
      %v454 = vld [vmem:[%s3 + $0x1] sm:$0x1]
      %v455 = vlaneseq
      %v456 = vshrl.u32 %v455, 7
      %v457 = vsub.s32 0, %v456
      %v458 = vrot.slane %v454, %v457
      %459 = vmatprep.subr.mxu0 0.0
      %460 = vmatpush1.msra.mxu0 %v453
      %461 = vmatprep.subr.mxu0 0.0
      %462 = vmatpush1.msra.mxu0 %v452
      %463 = vmatprep.subr.mxu0 0.0
      %464 = vmatpush1.msra.mxu0 %v451
      %465 = vmatprep.subr.mxu0 0.0
      %466 = vmatpush1.msra.mxu0 %v450
      %467 = vmatprep.subr.mxu0 0.0
      %468 = vmatpush1.msra.mxu0 %v449
      %469 = vmatprep.subr.mxu0 0.0
      %470 = vmatpush1.msra.mxu0 %v448
      %471 = vmatprep.subr.mxu0 0.0
      %472 = vmatpush1.msra.mxu0 %v447
      %473 = vmatprep.subr.mxu0 0.0
      %474 = vmatpush1.msra.mxu0 %v446
      %475 = vmatprep.subr.mxu0 0.0
      %476 = vmatpush1.msra.mxu0 %v445
      %477 = vmatprep.subr.mxu0 0.0
      %478 = vmatpush1.msra.mxu0 %v444
      %479 = vmatprep.subr.mxu0 0.0
      %480 = vmatpush1.msra.mxu0 %v443
      %481 = vmatprep.subr.mxu0 0.0
      %482 = vmatpush1.msra.mxu0 %v442
      %483 = vmatprep.subr.mxu0 0.0
      %484 = vmatpush1.msra.mxu0 %v441
      %485 = vmatprep.subr.mxu0 0.0
      %486 = vmatpush1.msra.mxu0 %v440
      %487 = vmatprep.subr.mxu0 0.0
      %488 = vmatpush1.msra.mxu0 %v439
      %489 = vmatprep.subr.mxu0 0.0
      %490 = vmatpush1.msra.mxu0 %v438
      %491 = vmatprep.subr.mxu0 0.0
      %492 = vmatpush2.msra.mxu0 0.0
      %493 = vmatprep.subr.mxu0 0.0
      %494 = vmatpush2.msra.mxu0 0.0
      %495 = vmatprep.subr.mxu0 0.0
      %496 = vmatpush2.msra.mxu0 0.0
      %497 = vmatprep.subr.mxu0 0.0
      %498 = vmatpush2.msra.mxu0 0.0
      %499 = vmatprep.subr.mxu0 0.0
      %500 = vmatpush2.msra.mxu0 0.0
      %501 = vmatprep.subr.mxu0 0.0
      %502 = vmatpush2.msra.mxu0 0.0
      %503 = vmatprep.subr.mxu0 0.0
      %504 = vmatpush2.msra.mxu0 0.0
      %505 = vmatprep.subr.mxu0 0.0
      %506 = vmatpush2.msra.mxu0 0.0
      %507 = vmatprep.subr.mxu0 0.0
      %508 = vmatpush2.msra.mxu0 0.0
      %509 = vmatprep.subr.mxu0 0.0
      %510 = vmatpush2.msra.mxu0 0.0
      %511 = vmatprep.subr.mxu0 0.0
      %512 = vmatpush2.msra.mxu0 0.0
      %513 = vmatprep.subr.mxu0 0.0
      %514 = vmatpush2.msra.mxu0 0.0
      %515 = vmatprep.subr.mxu0 0.0
      %516 = vmatpush2.msra.mxu0 0.0
      %517 = vmatprep.subr.mxu0 0.0
      %518 = vmatpush2.msra.mxu0 0.0
      %519 = vmatprep.subr.mxu0 0.0
      %520 = vmatpush2.msra.mxu0 0.0
      %521 = vmatprep.subr.mxu0 0.0
      %522 = vmatpush2.msra.mxu0 0.0
      %523 = vmatprep.mubr.f32.mxu0 0.0
      %524 = vmatmul.mubr.f32.gmra.mxu0 %v422
      %v525 = vpop.f32.mrf.mxu0
      %v526 = vadd.f32 %v458, %v525
      %v527 = vpop.f32.mrf.mxu0
      %528 = vmatprep.mubr.f32.mxu0 0.0
      %529 = vmatmul.mubr.f32.gmra.mxu0 %v423
      %v530 = vpop.f32.mrf.mxu0
      %v531 = vadd.f32 %v458, %v530
      %v532 = vpop.f32.mrf.mxu0
      %533 = vmatprep.mubr.f32.mxu0 0.0
      %534 = vmatmul.mubr.f32.gmra.mxu0 %v424
      %v535 = vpop.f32.mrf.mxu0
      %v536 = vadd.f32 %v458, %v535
      %v537 = vpop.f32.mrf.mxu0
      %538 = vmatprep.mubr.f32.mxu0 0.0
      %539 = vmatmul.mubr.f32.gmra.mxu0 %v425
      %v540 = vpop.f32.mrf.mxu0
      %v541 = vadd.f32 %v458, %v540
      %v542 = vpop.f32.mrf.mxu0
      %543 = vmatprep.mubr.f32.mxu0 0.0
      %544 = vmatmul.mubr.f32.gmra.mxu0 %v426
      %v545 = vpop.f32.mrf.mxu0
      %v546 = vadd.f32 %v458, %v545
      %v547 = vpop.f32.mrf.mxu0
      %548 = vmatprep.mubr.f32.mxu0 0.0
      %549 = vmatmul.mubr.f32.gmra.mxu0 %v427
      %v550 = vpop.f32.mrf.mxu0
      %v551 = vadd.f32 %v458, %v550
      %v552 = vpop.f32.mrf.mxu0
      %553 = vmatprep.mubr.f32.mxu0 0.0
      %554 = vmatmul.mubr.f32.gmra.mxu0 %v428
      %v555 = vpop.f32.mrf.mxu0
      %v556 = vadd.f32 %v458, %v555
      %v557 = vpop.f32.mrf.mxu0
      %558 = vmatprep.mubr.f32.mxu0 0.0
      %559 = vmatmul.mubr.f32.gmra.mxu0 %v429
      %v560 = vpop.f32.mrf.mxu0
      %v561 = vadd.f32 %v458, %v560
      %v562 = vpop.f32.mrf.mxu0
      %563 = vmatprep.mubr.f32.mxu0 0.0
      %564 = vmatmul.mubr.f32.gmra.mxu0 %v430
      %v565 = vpop.f32.mrf.mxu0
      %v566 = vadd.f32 %v458, %v565
      %v567 = vpop.f32.mrf.mxu0
      %568 = vmatprep.mubr.f32.mxu0 0.0
      %569 = vmatmul.mubr.f32.gmra.mxu0 %v431
      %v570 = vpop.f32.mrf.mxu0
      %v571 = vadd.f32 %v458, %v570
      %v572 = vpop.f32.mrf.mxu0
      %573 = vmatprep.mubr.f32.mxu0 0.0
      %574 = vmatmul.mubr.f32.gmra.mxu0 %v432
      %v575 = vpop.f32.mrf.mxu0
      %v576 = vadd.f32 %v458, %v575
      %v577 = vpop.f32.mrf.mxu0
      %578 = vmatprep.mubr.f32.mxu0 0.0
      %579 = vmatmul.mubr.f32.gmra.mxu0 %v433
      %v580 = vpop.f32.mrf.mxu0
      %v581 = vadd.f32 %v458, %v580
      %v582 = vpop.f32.mrf.mxu0
      %583 = vmatprep.mubr.f32.mxu0 0.0
      %584 = vmatmul.mubr.f32.gmra.mxu0 %v434
      %v585 = vpop.f32.mrf.mxu0
      %v586 = vadd.f32 %v458, %v585
      %v587 = vpop.f32.mrf.mxu0
      %588 = vmatprep.mubr.f32.mxu0 0.0
      %589 = vmatmul.mubr.f32.gmra.mxu0 %v435
      %v590 = vpop.f32.mrf.mxu0
      %v591 = vadd.f32 %v458, %v590
      %v592 = vpop.f32.mrf.mxu0
      %593 = vmatprep.mubr.f32.mxu0 0.0
      %594 = vmatmul.mubr.f32.gmra.mxu0 %v436
      %v595 = vpop.f32.mrf.mxu0
      %v596 = vadd.f32 %v458, %v595
      %v597 = vpop.f32.mrf.mxu0
      %598 = vmatprep.mubr.f32.mxu0 0.0
      %599 = vmatmul.mubr.f32.gmra.mxu0 %v437
      %v600 = vpop.f32.mrf.mxu0
      %v601 = vadd.f32 %v458, %v600
      %v602 = vpop.f32.mrf.mxu0
      %603 = vdwg.mxu0
      %620 = vrot.lane.b32.xlu0 %v526, 1
      %v621 = vpop.permute.xlu0 %620
      %622 = vrot.lane.b32.xlu0 %v531, 1
      %v623 = vpop.permute.xlu0 %622
      %624 = vrot.lane.b32.xlu0 %v536, 1
      %v625 = vpop.permute.xlu0 %624
      %626 = vrot.lane.b32.xlu0 %v541, 1
      %v627 = vpop.permute.xlu0 %626
      %628 = vrot.lane.b32.xlu0 %v546, 1
      %v629 = vpop.permute.xlu0 %628
      %630 = vrot.lane.b32.xlu0 %v551, 1
      %v631 = vpop.permute.xlu0 %630
      %632 = vrot.lane.b32.xlu0 %v556, 1
      %v633 = vpop.permute.xlu0 %632
      %634 = vrot.lane.b32.xlu0 %v561, 1
      %v635 = vpop.permute.xlu0 %634
      %636 = vrot.lane.b32.xlu0 %v566, 1
      %v637 = vpop.permute.xlu0 %636
      %638 = vrot.lane.b32.xlu0 %v571, 1
      %v639 = vpop.permute.xlu0 %638
      %640 = vrot.lane.b32.xlu0 %v576, 1
      %v641 = vpop.permute.xlu0 %640
      %642 = vrot.lane.b32.xlu0 %v581, 1
      %v643 = vpop.permute.xlu0 %642
      %644 = vrot.lane.b32.xlu0 %v586, 1
      %v645 = vpop.permute.xlu0 %644
      %646 = vrot.lane.b32.xlu0 %v591, 1
      %v647 = vpop.permute.xlu0 %646
      %648 = vrot.lane.b32.xlu0 %v596, 1
      %v649 = vpop.permute.xlu0 %648
      %650 = vrot.lane.b32.xlu0 %v601, 1
      %v651 = vpop.permute.xlu0 %650
      %v668 = vsub.f32 %v526, %v621
      %v669 = vsub.f32 %v531, %v623
      %v670 = vsub.f32 %v536, %v625
      %v671 = vsub.f32 %v541, %v627
      %v672 = vsub.f32 %v546, %v629
      %v673 = vsub.f32 %v551, %v631
      %v674 = vsub.f32 %v556, %v633
      %v675 = vsub.f32 %v561, %v635
      %v676 = vsub.f32 %v566, %v637
      %v677 = vsub.f32 %v571, %v639
      %v678 = vsub.f32 %v576, %v641
      %v679 = vsub.f32 %v581, %v643
      %v680 = vsub.f32 %v586, %v645
      %v681 = vsub.f32 %v591, %v647
      %v682 = vsub.f32 %v596, %v649
      %v683 = vsub.f32 %v601, %v651
      %v684 = vmul.f32 %v668, 1.442695
      %v685 = vpow.pop %v684
      %v686 = vmul.f32 %v669, 1.442695
      %v687 = vpow.pop %v686
      %v688 = vmul.f32 %v670, 1.442695
      %v689 = vpow.pop %v688
      %v690 = vmul.f32 %v671, 1.442695
      %v691 = vpow.pop %v690
      %v692 = vmul.f32 %v672, 1.442695
      %v693 = vpow.pop %v692
      %v694 = vmul.f32 %v673, 1.442695
      %v695 = vpow.pop %v694
      %v696 = vmul.f32 %v674, 1.442695
      %v697 = vpow.pop %v696
      %v698 = vmul.f32 %v675, 1.442695
      %v699 = vpow.pop %v698
      %v700 = vmul.f32 %v676, 1.442695
      %v701 = vpow.pop %v700
      %v702 = vmul.f32 %v677, 1.442695
      %v703 = vpow.pop %v702
      %v704 = vmul.f32 %v678, 1.442695
      %v705 = vpow.pop %v704
      %v706 = vmul.f32 %v679, 1.442695
      %v707 = vpow.pop %v706
      %v708 = vmul.f32 %v680, 1.442695
      %v709 = vpow.pop %v708
      %v710 = vmul.f32 %v681, 1.442695
      %v711 = vpow.pop %v710
      %v712 = vmul.f32 %v682, 1.442695
      %v713 = vpow.pop %v712
      %v714 = vmul.f32 %v683, 1.442695
      %v715 = vpow.pop %v714
      %v716 = vadd.f32 %v685, 1.0
      %v717 = vadd.f32 %v687, 1.0
      %v718 = vadd.f32 %v689, 1.0
      %v719 = vadd.f32 %v691, 1.0
      %v720 = vadd.f32 %v693, 1.0
      %v721 = vadd.f32 %v695, 1.0
      %v722 = vadd.f32 %v697, 1.0
      %v723 = vadd.f32 %v699, 1.0
      %v724 = vadd.f32 %v701, 1.0
      %v725 = vadd.f32 %v703, 1.0
      %v726 = vadd.f32 %v705, 1.0
      %v727 = vadd.f32 %v707, 1.0
      %v728 = vadd.f32 %v709, 1.0
      %v729 = vadd.f32 %v711, 1.0
      %v730 = vadd.f32 %v713, 1.0
      %v731 = vadd.f32 %v715, 1.0
      %v732 = vrcp.pop %v716
      %v733 = vmul.f32 1.0, %v732
      %v734 = vrcp.pop %v717
      %v735 = vmul.f32 1.0, %v734
      %v736 = vrcp.pop %v718
      %v737 = vmul.f32 1.0, %v736
      %v738 = vrcp.pop %v719
      %v739 = vmul.f32 1.0, %v738
      %v740 = vrcp.pop %v720
      %v741 = vmul.f32 1.0, %v740
      %v742 = vrcp.pop %v721
      %v743 = vmul.f32 1.0, %v742
      %v744 = vrcp.pop %v722
      %v745 = vmul.f32 1.0, %v744
      %v746 = vrcp.pop %v723
      %v747 = vmul.f32 1.0, %v746
      %v748 = vrcp.pop %v724
      %v749 = vmul.f32 1.0, %v748
      %v750 = vrcp.pop %v725
      %v751 = vmul.f32 1.0, %v750
      %v752 = vrcp.pop %v726
      %v753 = vmul.f32 1.0, %v752
      %v754 = vrcp.pop %v727
      %v755 = vmul.f32 1.0, %v754
      %v756 = vrcp.pop %v728
      %v757 = vmul.f32 1.0, %v756
      %v758 = vrcp.pop %v729
      %v759 = vmul.f32 1.0, %v758
      %v760 = vrcp.pop %v730
      %v761 = vmul.f32 1.0, %v760
      %v762 = vrcp.pop %v731
      %v763 = vmul.f32 1.0, %v762
      %v764 = vsub.f32 1.0, %v733
      %v765 = vsub.f32 1.0, %v735
      %v766 = vsub.f32 1.0, %v737
      %v767 = vsub.f32 1.0, %v739
      %v768 = vsub.f32 1.0, %v741
      %v769 = vsub.f32 1.0, %v743
      %v770 = vsub.f32 1.0, %v745
      %v771 = vsub.f32 1.0, %v747
      %v772 = vsub.f32 1.0, %v749
      %v773 = vsub.f32 1.0, %v751
      %v774 = vsub.f32 1.0, %v753
      %v775 = vsub.f32 1.0, %v755
      %v776 = vsub.f32 1.0, %v757
      %v777 = vsub.f32 1.0, %v759
      %v778 = vsub.f32 1.0, %v761
      %v779 = vsub.f32 1.0, %v763
      %v780 = vlaneseq
      %v781 = vand.u32 %v780, 127
      %vm782 = vcmp.eq.s32.totalorder %v781, 0
      %vm783 = vcmp.eq.s32.totalorder %v781, 1
      %vm784 = vcmp.eq.s32.totalorder %v781, 2
      %785 = vset.pattern.permute.xlu0 2
      %786 = vperm.xlu0 %785, %v526
      %v787 = vpop.permute.xlu0 %786
      %789 = vset.pattern.permute.xlu0 2
      %790 = vperm.xlu0 %789, %v531
      %v791 = vpop.permute.xlu0 %790
      %793 = vset.pattern.permute.xlu0 2
      %794 = vperm.xlu0 %793, %v536
      %v795 = vpop.permute.xlu0 %794
      %797 = vset.pattern.permute.xlu0 2
      %798 = vperm.xlu0 %797, %v541
      %v799 = vpop.permute.xlu0 %798
      %801 = vset.pattern.permute.xlu0 2
      %802 = vperm.xlu0 %801, %v546
      %v803 = vpop.permute.xlu0 %802
      %805 = vset.pattern.permute.xlu0 2
      %806 = vperm.xlu0 %805, %v551
      %v807 = vpop.permute.xlu0 %806
      %809 = vset.pattern.permute.xlu0 2
      %810 = vperm.xlu0 %809, %v556
      %v811 = vpop.permute.xlu0 %810
      %813 = vset.pattern.permute.xlu0 2
      %814 = vperm.xlu0 %813, %v561
      %v815 = vpop.permute.xlu0 %814
      %817 = vset.pattern.permute.xlu0 2
      %818 = vperm.xlu0 %817, %v566
      %v819 = vpop.permute.xlu0 %818
      %821 = vset.pattern.permute.xlu0 2
      %822 = vperm.xlu0 %821, %v571
      %v823 = vpop.permute.xlu0 %822
      %825 = vset.pattern.permute.xlu0 2
      %826 = vperm.xlu0 %825, %v576
      %v827 = vpop.permute.xlu0 %826
      %829 = vset.pattern.permute.xlu0 2
      %830 = vperm.xlu0 %829, %v581
      %v831 = vpop.permute.xlu0 %830
      %833 = vset.pattern.permute.xlu0 2
      %834 = vperm.xlu0 %833, %v586
      %v835 = vpop.permute.xlu0 %834
      %837 = vset.pattern.permute.xlu0 2
      %838 = vperm.xlu0 %837, %v591
      %v839 = vpop.permute.xlu0 %838
      %841 = vset.pattern.permute.xlu0 2
      %842 = vperm.xlu0 %841, %v596
      %v843 = vpop.permute.xlu0 %842
      %845 = vset.pattern.permute.xlu0 2
      %846 = vperm.xlu0 %845, %v601
      %v847 = vpop.permute.xlu0 %846
      %v849 = vsel %vm784, %v787, 0.0
      %v850 = vsel %vm784, %v791, 0.0
      %v851 = vsel %vm784, %v795, 0.0
      %v852 = vsel %vm784, %v799, 0.0
      %v853 = vsel %vm784, %v803, 0.0
      %v854 = vsel %vm784, %v807, 0.0
      %v855 = vsel %vm784, %v811, 0.0
      %v856 = vsel %vm784, %v815, 0.0
      %v857 = vsel %vm784, %v819, 0.0
      %v858 = vsel %vm784, %v823, 0.0
      %v859 = vsel %vm784, %v827, 0.0
      %v860 = vsel %vm784, %v831, 0.0
      %v861 = vsel %vm784, %v835, 0.0
      %v862 = vsel %vm784, %v839, 0.0
      %v863 = vsel %vm784, %v843, 0.0
      %v864 = vsel %vm784, %v847, 0.0
      %866 = vset.pattern.permute.xlu0 1
      %867 = vperm.xlu0 %866, %v764
      %v868 = vpop.permute.xlu0 %867
      %871 = vset.pattern.permute.xlu0 1
      %872 = vperm.xlu0 %871, %v765
      %v873 = vpop.permute.xlu0 %872
      %876 = vset.pattern.permute.xlu0 1
      %877 = vperm.xlu0 %876, %v766
      %v878 = vpop.permute.xlu0 %877
      %881 = vset.pattern.permute.xlu0 1
      %882 = vperm.xlu0 %881, %v767
      %v883 = vpop.permute.xlu0 %882
      %886 = vset.pattern.permute.xlu0 1
      %887 = vperm.xlu0 %886, %v768
      %v888 = vpop.permute.xlu0 %887
      %891 = vset.pattern.permute.xlu0 1
      %892 = vperm.xlu0 %891, %v769
      %v893 = vpop.permute.xlu0 %892
      %896 = vset.pattern.permute.xlu0 1
      %897 = vperm.xlu0 %896, %v770
      %v898 = vpop.permute.xlu0 %897
      %901 = vset.pattern.permute.xlu0 1
      %902 = vperm.xlu0 %901, %v771
      %v903 = vpop.permute.xlu0 %902
      %906 = vset.pattern.permute.xlu0 1
      %907 = vperm.xlu0 %906, %v772
      %v908 = vpop.permute.xlu0 %907
      %911 = vset.pattern.permute.xlu0 1
      %912 = vperm.xlu0 %911, %v773
      %v913 = vpop.permute.xlu0 %912
      %916 = vset.pattern.permute.xlu0 1
      %917 = vperm.xlu0 %916, %v774
      %v918 = vpop.permute.xlu0 %917
      %921 = vset.pattern.permute.xlu0 1
      %922 = vperm.xlu0 %921, %v775
      %v923 = vpop.permute.xlu0 %922
      %926 = vset.pattern.permute.xlu0 1
      %927 = vperm.xlu0 %926, %v776
      %v928 = vpop.permute.xlu0 %927
      %931 = vset.pattern.permute.xlu0 1
      %932 = vperm.xlu0 %931, %v777
      %v933 = vpop.permute.xlu0 %932
      %936 = vset.pattern.permute.xlu0 1
      %937 = vperm.xlu0 %936, %v778
      %v938 = vpop.permute.xlu0 %937
      %941 = vset.pattern.permute.xlu0 1
      %942 = vperm.xlu0 %941, %v779
      %v943 = vpop.permute.xlu0 %942
      %v945 = vsel %vm783, %v868, %v849
      %v946 = vsel %vm783, %v873, %v850
      %v947 = vsel %vm783, %v878, %v851
      %v948 = vsel %vm783, %v883, %v852
      %v949 = vsel %vm783, %v888, %v853
      %v950 = vsel %vm783, %v893, %v854
      %v951 = vsel %vm783, %v898, %v855
      %v952 = vsel %vm783, %v903, %v856
      %v953 = vsel %vm783, %v908, %v857
      %v954 = vsel %vm783, %v913, %v858
      %v955 = vsel %vm783, %v918, %v859
      %v956 = vsel %vm783, %v923, %v860
      %v957 = vsel %vm783, %v928, %v861
      %v958 = vsel %vm783, %v933, %v862
      %v959 = vsel %vm783, %v938, %v863
      %v960 = vsel %vm783, %v943, %v864
      %962 = vset.pattern.permute.xlu0 1
      %963 = vperm.xlu0 %962, %v733
      %v964 = vpop.permute.xlu0 %963
      %967 = vset.pattern.permute.xlu0 1
      %968 = vperm.xlu0 %967, %v735
      %v969 = vpop.permute.xlu0 %968
      %972 = vset.pattern.permute.xlu0 1
      %973 = vperm.xlu0 %972, %v737
      %v974 = vpop.permute.xlu0 %973
      %977 = vset.pattern.permute.xlu0 1
      %978 = vperm.xlu0 %977, %v739
      %v979 = vpop.permute.xlu0 %978
      %982 = vset.pattern.permute.xlu0 1
      %983 = vperm.xlu0 %982, %v741
      %v984 = vpop.permute.xlu0 %983
      %987 = vset.pattern.permute.xlu0 1
      %988 = vperm.xlu0 %987, %v743
      %v989 = vpop.permute.xlu0 %988
      %992 = vset.pattern.permute.xlu0 1
      %993 = vperm.xlu0 %992, %v745
      %v994 = vpop.permute.xlu0 %993
      %997 = vset.pattern.permute.xlu0 1
      %998 = vperm.xlu0 %997, %v747
      %v999 = vpop.permute.xlu0 %998
      %1002 = vset.pattern.permute.xlu0 1
      %1003 = vperm.xlu0 %1002, %v749
      %v1004 = vpop.permute.xlu0 %1003
      %1007 = vset.pattern.permute.xlu0 1
      %1008 = vperm.xlu0 %1007, %v751
      %v1009 = vpop.permute.xlu0 %1008
      %1012 = vset.pattern.permute.xlu0 1
      %1013 = vperm.xlu0 %1012, %v753
      %v1014 = vpop.permute.xlu0 %1013
      %1017 = vset.pattern.permute.xlu0 1
      %1018 = vperm.xlu0 %1017, %v755
      %v1019 = vpop.permute.xlu0 %1018
      %1022 = vset.pattern.permute.xlu0 1
      %1023 = vperm.xlu0 %1022, %v757
      %v1024 = vpop.permute.xlu0 %1023
      %1027 = vset.pattern.permute.xlu0 1
      %1028 = vperm.xlu0 %1027, %v759
      %v1029 = vpop.permute.xlu0 %1028
      %1032 = vset.pattern.permute.xlu0 1
      %1033 = vperm.xlu0 %1032, %v761
      %v1034 = vpop.permute.xlu0 %1033
      %1037 = vset.pattern.permute.xlu0 1
      %1038 = vperm.xlu0 %1037, %v763
      %v1039 = vpop.permute.xlu0 %1038
      %v1041 = vsel %vm782, %v964, %v945
      %v1042 = vsel %vm782, %v969, %v946
      %v1043 = vsel %vm782, %v974, %v947
      %v1044 = vsel %vm782, %v979, %v948
      %v1045 = vsel %vm782, %v984, %v949
      %v1046 = vsel %vm782, %v989, %v950
      %v1047 = vsel %vm782, %v994, %v951
      %v1048 = vsel %vm782, %v999, %v952
      %v1049 = vsel %vm782, %v1004, %v953
      %v1050 = vsel %vm782, %v1009, %v954
      %v1051 = vsel %vm782, %v1014, %v955
      %v1052 = vsel %vm782, %v1019, %v956
      %v1053 = vsel %vm782, %v1024, %v957
      %v1054 = vsel %vm782, %v1029, %v958
      %v1055 = vsel %vm782, %v1034, %v959
      %v1056 = vsel %vm782, %v1039, %v960
      %1057 = vst [vmem:[%s199] sm:$0xff] %v1041
      %1058 = vst [vmem:[%s199 + $0x8] sm:$0xff] %v1042
      %1059 = vst [vmem:[%s199 + $0x10] sm:$0xff] %v1043
      %1060 = vst [vmem:[%s199 + $0x18] sm:$0xff] %v1044
      %1061 = vst [vmem:[%s199 + $0x20] sm:$0xff] %v1045
      %1062 = vst [vmem:[%s199 + $0x28] sm:$0xff] %v1046
      %1063 = vst [vmem:[%s199 + $0x30] sm:$0xff] %v1047
      %1064 = vst [vmem:[%s199 + $0x38] sm:$0xff] %v1048
      %1065 = vst [vmem:[%s199 + $0x40] sm:$0xff] %v1049
      %1066 = vst [vmem:[%s199 + $0x48] sm:$0xff] %v1050
      %1067 = vst [vmem:[%s199 + $0x50] sm:$0xff] %v1051
      %1068 = vst [vmem:[%s199 + $0x58] sm:$0xff] %v1052
      %1069 = vst [vmem:[%s199 + $0x60] sm:$0xff] %v1053
      %1070 = vst [vmem:[%s199 + $0x68] sm:$0xff] %v1054
      %1071 = vst [vmem:[%s199 + $0x70] sm:$0xff] %v1055
      %1072 = vst [vmem:[%s199 + $0x78] sm:$0xff] %v1056
      %s1073 = smul.u32 16, %s15
      %p1074 = scmp.lt.s32.totalorder %s1073, 31
      %s1075 = scalar_select %p1074, %s1073, 31
      %s1076 = smul.addr %s1075, 8
      %s1077 = scalar_lea.vmem %s4, %s1076
      // Predicated region
      $region37: #{policy_forward.1} parent=35 // pred_check
        %p1078 = pneg %p122
      $region38: #{policy_forward.1} parent=35 // pred_check_branch
        %1080 = sbr.rel (%p1078) target = $region40
      $region39: #{policy_forward.1} parent=35 // pred_region
        %s1081 = smul.u32 16, %s15
      $region40: #{policy_forward.1} parent=35 // pred_fallthru
        _
    $region36: #{policy_forward.1} parent=5 // pred_fallthru
      _
    %p1082 = scmp.le.s32.totalorder 2, %s10
    // Predicated region
    $region41: #{policy_forward.1} parent=5 // pred_check
      %p1083 = pneg %p1082
    $region42: #{policy_forward.1} parent=5 // pred_check_branch
      %1085 = sbr.rel (%p1083) target = $region44
    $region43: #{policy_forward.1} parent=5 // pred_region
      %s1086 = ssub.s32 %s10, 2
      // Predicated region
      $region45: #{policy_forward.1} parent=43 // pred_check
        %p1087 = pneg %p128
      $region46: #{policy_forward.1} parent=43 // pred_check_branch
        %1089 = sbr.rel (%p1087) target = $region48
      $region47: #{policy_forward.1} parent=43 // pred_region
        %s1090 = smul.u32 16, %s16
        %p1091 = scmp.lt.s32.totalorder %s1090, 31
        %s1092 = scalar_select %p1091, %s1090, 31
        %s1093 = smul.addr %s1092, 8
        %s1094 = scalar_lea.vmem %s4, %s1093
      $region48: #{policy_forward.1} parent=43 // pred_fallthru
        _
    $region44: #{policy_forward.1} parent=5 // pred_fallthru
      _
  $region6: #{policy_forward.1} parent=0 // loop_footer
    %s14 = sadd.s32 1, %s10
  $region7: #{policy_forward.1} parent=0 // loop_footer_branch
    %9 = sbr.rel target = $region3
  $region8: #{policy_forward.1} parent=0 // loop_exit
    _

</llo_original>
